<compile_context>
chip_gen: v5e
topology: v5e:2x2
jax: 0.10.0
libtpu: 0.0.40
codegen_flags: <defaults>
</compile_context>

<pallas_src>
import functools

import jax
import jax.numpy as jnp
from jax import lax
from jax.experimental import pallas as pl
from jax.experimental.pallas import tpu as pltpu

LANE = 128  # TPU lane width


# ----------------------------------------------------------------------------
# Pallas kernel: fused one-hot MXU gather (token compaction) + classifier matmul
# ----------------------------------------------------------------------------
def _compact_classify_kernel(src_ref, h_ref, w_ref, b_ref, vo_ref, lg_ref):
    # src_ref : VMEM (Bblk, S) int32 -- src[b, k] = position of the k-th valid
    #                                    token of sequence b, or -1 if k >= nvalid
    # h_ref   : VMEM (Bblk, S, H) f32 -- last_hidden_state block
    # w_ref   : VMEM (H, L_pad) f32
    # b_ref   : VMEM (1, L_pad) f32
    # vo_ref  : VMEM (Bblk, S, H) f32     (output: compacted valid tokens, zero-padded)
    # lg_ref  : VMEM (Bblk, S, L_pad) f32 (output: classifier logits, lane-dense)
    Bblk, S, H = h_ref.shape
    L_pad = w_ref.shape[1]

    src = src_ref[...]                                           # [Bblk, S]
    col = lax.broadcasted_iota(jnp.int32, (Bblk, S, S), 2)       # source position j
    sel = (col == src[:, :, None]).astype(jnp.float32)           # one-hot [Bblk, S, S]
    # (src == -1 rows are all-zero -> exact zeros for k >= nvalid.)

    # Row gather as a batched MXU matmul.  HIGHEST precision keeps the f32 row
    # copies bit-exact (one-hot rows select exactly one hidden vector).
    vo = jnp.einsum('bks,bsh->bkh', sel, h_ref[...],
                    preferred_element_type=jnp.float32,
                    precision=lax.Precision.HIGHEST)
    vo_ref[...] = vo

    # Fused classifier Linear(H -> L_pad).  Logits only feed the CRF argmax, so
    # DEFAULT matmul precision is sufficient (frees MXU passes).
    flat = vo.reshape(Bblk * S, H)
    lg = jnp.dot(flat, w_ref[...], preferred_element_type=jnp.float32)
    lg_ref[...] = lg.reshape(Bblk, S, L_pad) + b_ref[...]


def valid_compact_and_classify(last_hidden_state, valid_ids, w_cls, b_cls,
                               bblk=None):
    """Returns (valid_output [B,S,H], logits [B,S,L], nvalid [B])."""
    B, S, H = last_hidden_state.shape
    L = w_cls.shape[1]
    L_pad = max(LANE, pl.cdiv(L, LANE) * LANE)

    # Glue: compaction index table.  src[b, k] = position of the k-th valid
    # token of sequence b; -1 sentinel for k >= nvalid (yields all-zero one-hot
    # rows in the kernel).
    v = (valid_ids == 1)
    nvalid = jnp.sum(v.astype(jnp.int32), axis=1).astype(jnp.int32)      # [B]
    pos = jnp.arange(S, dtype=jnp.int32)
    sort_key = jnp.where(v, pos[None, :], pos[None, :] + S)              # valid first
    src = jnp.argsort(sort_key, axis=1).astype(jnp.int32)                # [B, S]
    src = jnp.where(pos[None, :] < nvalid[:, None], src, jnp.int32(-1))  # sentinel

    # Zero-pad classifier to a lane-dense 128-wide N dimension.
    w_pad = jnp.zeros((H, L_pad), jnp.float32).at[:, :L].set(
        w_cls.astype(jnp.float32))
    b_pad = jnp.zeros((1, L_pad), jnp.float32).at[:, :L].set(
        b_cls.reshape(1, L).astype(jnp.float32))

    # Batch blocking: pick Bblk from a conservative ~16 MiB per-step VMEM budget
    # (double-buffered h-in / vo-out / logits-out + one-hot + vo temp).
    if bblk is None:
        budget = 16 * 1024 * 1024
        per_elem = 4 * (5 * S * H + 2 * S * L_pad + S * S + 2 * S)
        bblk = int(max(1, budget // max(per_elem, 1)))
    if bblk >= B:
        bblk = B                       # single block covering the whole batch
    else:
        bblk = max(8, (bblk // 8) * 8)  # sublane-aligned so the src block tiles cleanly
    nb = pl.cdiv(B, bblk)
    Bp = nb * bblk
    if Bp != B:
        padn = Bp - B
        last_hidden_state = jnp.pad(last_hidden_state,
                                    ((0, padn), (0, 0), (0, 0)))
        src = jnp.pad(src, ((0, padn), (0, 0)), constant_values=-1)

    valid_output, logits_pad = pl.pallas_call(
        _compact_classify_kernel,
        out_shape=(
            jax.ShapeDtypeStruct((Bp, S, H), jnp.float32),
            jax.ShapeDtypeStruct((Bp, S, L_pad), jnp.float32),
        ),
        grid_spec=pltpu.PrefetchScalarGridSpec(
            num_scalar_prefetch=0,
            grid=(nb,),
            in_specs=[
                pl.BlockSpec((bblk, S), lambda i: (i, 0)),
                pl.BlockSpec((bblk, S, H), lambda i: (i, 0, 0)),
                pl.BlockSpec((H, L_pad), lambda i: (0, 0)),
                pl.BlockSpec((1, L_pad), lambda i: (0, 0)),
            ],
            out_specs=[
                pl.BlockSpec((bblk, S, H), lambda i: (i, 0, 0)),
                pl.BlockSpec((bblk, S, L_pad), lambda i: (i, 0, 0)),
            ],
        ),
        compiler_params=pltpu.CompilerParams(
            dimension_semantics=("parallel",),      # batch blocks are independent
            vmem_limit_bytes=32 * 1024 * 1024),     # explicit, safe on v5e/v6e/v7x
    )(src, last_hidden_state.astype(jnp.float32), w_pad, b_pad)

    valid_output = valid_output[:B]
    logits = logits_pad[:B, :, :L]                 # CRF only sees real labels
    return valid_output, logits, nvalid


# ----------------------------------------------------------------------------
# CRF Viterbi decode (torchcrf semantics, batch_first), plain JAX glue
# ----------------------------------------------------------------------------
def crf_decode(emissions, mask, start_trans, end_trans, trans):
    """emissions [B,S,L], mask [B,S] bool -> decoded tags [B,S] int32 (0-padded)."""
    B, S, L = emissions.shape
    mask = mask.astype(bool)

    score = start_trans[None, :] + emissions[:, 0]                 # [B, L]

    def fwd(score, xs):
        emit_t, mask_t = xs                                        # [B,L], [B]
        cand = score[:, :, None] + trans[None, :, :]               # [B, prev, next]
        indices = jnp.argmax(cand, axis=1).astype(jnp.int32)       # [B, L]
        next_score = jnp.max(cand, axis=1) + emit_t                # [B, L]
        new_score = jnp.where(mask_t[:, None], next_score, score)
        return new_score, indices

    em_t = jnp.swapaxes(emissions, 0, 1)                           # [S, B, L]
    mk_t = jnp.swapaxes(mask, 0, 1)                                # [S, B]
    score, history = lax.scan(fwd, score, (em_t[1:], mk_t[1:]))    # history [S-1,B,L]
    score = score + end_trans[None, :]

    best_last = jnp.argmax(score, axis=1).astype(jnp.int32)        # [B]
    seq_end = jnp.sum(mask.astype(jnp.int32), axis=1) - 1          # [B]

    def bwd(cur, xs):
        t, hist_t = xs                                             # scalar, [B, L]
        prev = jnp.take_along_axis(hist_t, cur[:, None], axis=1)[:, 0].astype(jnp.int32)
        use = t < seq_end                                          # [B]
        new_cur = jnp.where(use, prev, cur)
        out_t = jnp.where(use, new_cur, 0)
        return new_cur, out_t

    ts = jnp.arange(S - 1, dtype=jnp.int32)
    _, outs = lax.scan(bwd, best_last, (ts, history), reverse=True)  # [S-1, B]
    tags_lower = jnp.swapaxes(outs, 0, 1)                          # [B, S-1]
    tags_full = jnp.concatenate(
        [tags_lower, jnp.zeros((B, 1), jnp.int32)], axis=1)        # [B, S]

    pos = jnp.arange(S, dtype=jnp.int32)[None, :]
    tags = jnp.where(pos == seq_end[:, None], best_last[:, None], tags_full)
    tags = jnp.where(pos <= seq_end[:, None], tags, 0)             # pad with 0
    return tags


# ----------------------------------------------------------------------------
# Full forward, mirroring Bert_entity.forward (inference / labels=None path)
# ----------------------------------------------------------------------------
@functools.partial(jax.jit, static_argnames=())
def bert_entity_forward(last_hidden_state, valid_ids, w_cls, b_cls,
                        start_trans, end_trans, trans):
    B, S, _ = last_hidden_state.shape

    valid_output, logits, nvalid = valid_compact_and_classify(
        last_hidden_state, valid_ids, w_cls, b_cls)

    # dropout(p=0.4) -> identity at inference time.

    valid_masks = jnp.arange(S, dtype=jnp.int32)[None, :] < nvalid[:, None]

    decoded = crf_decode(logits, valid_masks, start_trans, end_trans, trans)

    # torch returns: (None, logits(=decoded tag sequences), last_hidden_state,
    #                 valid_output, output.attentions)
    return decoded, last_hidden_state, valid_output, logits, valid_masks


if __name__ == "__main__":
    # Small shapes standing in for the real model (hidden 768 -> 128, labels -> 8).
    B, S, H, L = 2, 8, 128, 8

    key = jax.random.PRNGKey(0)
    k1, k2, k3, k4, k5, k6, k7 = jax.random.split(key, 7)

    last_hidden_state = jax.random.normal(k1, (B, S, H), dtype=jnp.float32)
    valid_ids = (jax.random.uniform(k2, (B, S)) < 0.6).astype(jnp.int32)
    valid_ids = valid_ids.at[:, 0].set(1)  # CRF requires mask[:, 0] == 1

    # Classifier (nn.Linear(768, num_labels)) parameters, deterministic init.
    w_cls = (jax.random.normal(k3, (H, L), dtype=jnp.float32) * 0.02)
    b_cls = (jax.random.normal(k4, (L,), dtype=jnp.float32) * 0.02)

    # CRF parameters (torchcrf init: uniform(-0.1, 0.1)).
    start_trans = jax.random.uniform(k5, (L,), minval=-0.1, maxval=0.1)
    end_trans = jax.random.uniform(k6, (L,), minval=-0.1, maxval=0.1)
    trans = jax.random.uniform(k7, (L, L), minval=-0.1, maxval=0.1)

    decoded, lhs, valid_output, logits, valid_masks = bert_entity_forward(
        last_hidden_state, valid_ids, w_cls, b_cls, start_trans, end_trans, trans)

    jax.block_until_ready((decoded, lhs, valid_output, logits, valid_masks))

    assert decoded.shape == (B, S)
    assert valid_output.shape == (B, S, H)
    assert logits.shape == (B, S, L)

    # Sanity check of the compaction against a pure-JAX reference.
    v = (valid_ids == 1)
    nvalid = jnp.sum(v.astype(jnp.int32), axis=1)
    pos = jnp.arange(S, dtype=jnp.int32)
    src = jnp.argsort(jnp.where(v, pos[None, :], pos[None, :] + S), axis=1)
    ref_vo = jnp.where((pos[None, :, None] < nvalid[:, None, None]),
                       jnp.take_along_axis(last_hidden_state, src[:, :, None], axis=1),
                       0.0)
    assert bool(jnp.allclose(valid_output, ref_vo, rtol=0.0, atol=1e-6))

    # Loose check of the fused classifier (DEFAULT matmul precision on the MXU).
    ref_logits = ref_vo @ w_cls + b_cls[None, None, :]
    assert bool(jnp.allclose(logits, ref_logits, rtol=2e-2, atol=2e-2))

    print("KERNEL_OK")
</pallas_src>

<mosaic_0001>
module attributes {stable_mosaic.version = 11 : i64} {
  func.func @_compact_classify_kernel(%arg0: i32, %arg1: memref<2x8xi32, #tpu.memory_space<vmem>>, %arg2: memref<2x8x128xf32, #tpu.memory_space<vmem>>, %arg3: memref<128x128xf32, #tpu.memory_space<vmem>>, %arg4: memref<1x128xf32, #tpu.memory_space<vmem>>, %arg5: memref<2x8x128xf32, #tpu.memory_space<vmem>>, %arg6: memref<2x8x128xf32, #tpu.memory_space<vmem>>) attributes {dimension_semantics = [#tpu.dimension_semantics<parallel>], iteration_bounds = array<i64: 1>, scalar_prefetch = 0 : i64, scratch_operands = 0 : i64, tpu.core_type = #tpu.core_type<tc>, window_params = [{transform_indices = @transform_0, window_bounds = array<i64: 2, 8>}, {transform_indices = @transform_1, window_bounds = array<i64: 2, 8, 128>}, {pipeline_mode = #tpu.pipeline_mode<synchronous>, transform_indices = @transform_2, window_bounds = array<i64: 128, 128>}, {pipeline_mode = #tpu.pipeline_mode<synchronous>, transform_indices = @transform_3, window_bounds = array<i64: 1, 128>}, {transform_indices = @transform_4, window_bounds = array<i64: 2, 8, 128>}, {transform_indices = @transform_5, window_bounds = array<i64: 2, 8, 128>}]} {
    %c0 = arith.constant 0 : index
    %c0_0 = arith.constant 0 : index
    %0 = vector.load %arg1[%c0, %c0_0] : memref<2x8xi32, #tpu.memory_space<vmem>>, vector<2x8xi32>
    %1 = tpu.iota {dimensions = array<i32: 2>} : vector<2x8x8xi32>
    %2 = vector.shape_cast %0 : vector<2x8xi32> to vector<2x8x1xi32>
    %3 = vector.broadcast %2 : vector<2x8x1xi32> to vector<2x8x8xi32>
    %4 = arith.cmpi eq, %1, %3 : vector<2x8x8xi32>
    %5 = arith.extui %4 : vector<2x8x8xi1> to vector<2x8x8xi32>
    %6 = arith.sitofp %5 : vector<2x8x8xi32> to vector<2x8x8xf32>
    %c0_1 = arith.constant 0 : index
    %c0_2 = arith.constant 0 : index
    %c0_3 = arith.constant 0 : index
    %7 = vector.load %arg2[%c0_1, %c0_2, %c0_3] : memref<2x8x128xf32, #tpu.memory_space<vmem>>, vector<2x8x128xf32>
    "tpu.trace_start"() <{level = 10 : i32, message = "bks,bsh->bkh"}> : () -> ()
    %cst = arith.constant dense<0.000000e+00> : vector<2x8x128xf32>
    %8 = tpu.matmul %6, %7, %cst {dimension_numbers = #tpu.dot_dimension_numbers<[2], [1], [1], [2], [0, 0, 0, 1, 1, 2], [0], [0]>, precision = #tpu.contract_precision<fp32>} : vector<2x8x8xf32>, vector<2x8x128xf32>, vector<2x8x128xf32> -> vector<2x8x128xf32>
    "tpu.trace_stop"() : () -> ()
    %c0_4 = arith.constant 0 : index
    %c0_5 = arith.constant 0 : index
    %c0_6 = arith.constant 0 : index
    %9 = vector.load %arg5[%c0_4, %c0_5, %c0_6] : memref<2x8x128xf32, #tpu.memory_space<vmem>>, vector<2x8x128xf32>
    tpu.vector_store %arg5[%c0_4, %c0_5, %c0_6], %8 {strides = array<i32>} : memref<2x8x128xf32, #tpu.memory_space<vmem>>, vector<2x8x128xf32>,
    %10 = vector.shape_cast %8 : vector<2x8x128xf32> to vector<16x128xf32>
    %c0_7 = arith.constant 0 : index
    %c0_8 = arith.constant 0 : index
    %11 = vector.load %arg3[%c0_7, %c0_8] : memref<128x128xf32, #tpu.memory_space<vmem>>, vector<128x128xf32>
    %cst_9 = arith.constant dense<0.000000e+00> : vector<16x128xf32>
    %12 = tpu.matmul %10, %11, %cst_9 {dimension_numbers = #tpu.dot_dimension_numbers<[1], [0], [0], [1], [0, 0, 1, 1], [], []>} : vector<16x128xf32>, vector<128x128xf32>, vector<16x128xf32> -> vector<16x128xf32>
    %13 = vector.shape_cast %12 : vector<16x128xf32> to vector<2x8x128xf32>
    %c0_10 = arith.constant 0 : index
    %c0_11 = arith.constant 0 : index
    %14 = vector.load %arg4[%c0_10, %c0_11] : memref<1x128xf32, #tpu.memory_space<vmem>>, vector<1x128xf32>
    %15 = vector.shape_cast %14 : vector<1x128xf32> to vector<1x1x128xf32>
    %16 = vector.broadcast %15 : vector<1x1x128xf32> to vector<2x8x128xf32>
    %17 = arith.addf %13, %16 : vector<2x8x128xf32>
    %c0_12 = arith.constant 0 : index
    %c0_13 = arith.constant 0 : index
    %c0_14 = arith.constant 0 : index
    %18 = vector.load %arg6[%c0_12, %c0_13, %c0_14] : memref<2x8x128xf32, #tpu.memory_space<vmem>>, vector<2x8x128xf32>
    tpu.vector_store %arg6[%c0_12, %c0_13, %c0_14], %17 {strides = array<i32>} : memref<2x8x128xf32, #tpu.memory_space<vmem>>, vector<2x8x128xf32>,
    return
  }
  func.func @transform_0(%arg0: i32) -> (i32, i32) {
    %c0_i32 = arith.constant 0 : i32
    %c0_i32_0 = arith.constant 0 : i32
    return %arg0, %c0_i32 : i32, i32
  }
  func.func @transform_1(%arg0: i32) -> (i32, i32, i32) {
    %c0_i32 = arith.constant 0 : i32
    %c0_i32_0 = arith.constant 0 : i32
    %c0_i32_1 = arith.constant 0 : i32
    return %arg0, %c0_i32, %c0_i32_0 : i32, i32, i32
  }
  func.func @transform_2(%arg0: i32) -> (i32, i32) {
    %c0_i32 = arith.constant 0 : i32
    %c0_i32_0 = arith.constant 0 : i32
    %c0_i32_1 = arith.constant 0 : i32
    return %c0_i32, %c0_i32_0 : i32, i32
  }
  func.func @transform_3(%arg0: i32) -> (i32, i32) {
    %c0_i32 = arith.constant 0 : i32
    %c0_i32_0 = arith.constant 0 : i32
    %c0_i32_1 = arith.constant 0 : i32
    return %c0_i32, %c0_i32_0 : i32, i32
  }
  func.func @transform_4(%arg0: i32) -> (i32, i32, i32) {
    %c0_i32 = arith.constant 0 : i32
    %c0_i32_0 = arith.constant 0 : i32
    %c0_i32_1 = arith.constant 0 : i32
    return %arg0, %c0_i32, %c0_i32_0 : i32, i32, i32
  }
  func.func @transform_5(%arg0: i32) -> (i32, i32, i32) {
    %c0_i32 = arith.constant 0 : i32
    %c0_i32_0 = arith.constant 0 : i32
    %c0_i32_1 = arith.constant 0 : i32
    return %arg0, %c0_i32, %c0_i32_0 : i32, i32, i32
  }
}

</mosaic_0001>

<llo_original>
// kernel: custom-call.2
$region0: #{custom-call.2}
  %s0 = inlined_call_operand.vmem [shape: s32[7,2,8], index: 0, kind: output, shape index: {}]

// kernel: bert_entity_forward.1
$region0: #{bert_entity_forward.1}
  #allocation0 [shape = 'u32[]', space=smem, size = 0x4, offset = 0x4, fixed_abs, tag = 'smem constant byte address 0x4 - core index']
  #allocation1 [shape = 'u32[72,128]{1,0:T(1,128)}', space=vmem, size = 0x9000, scoped, tag = 'internal scratch']
  %s0 = inlined_call_operand.vmem [shape: s32[2,8], index: 0, kind: input, shape index: {}]
  %s1 = inlined_call_operand.vmem [shape: f32[2,8,128], index: 1, kind: input, shape index: {}]
  %s2 = inlined_call_operand.vmem [shape: f32[128,128], index: 2, kind: input, shape index: {}]
  %s3 = inlined_call_operand.vmem [shape: f32[1,128], index: 3, kind: input, shape index: {}]
  %s4 = inlined_call_operand.hbm [shape: f32[2,8,128], index: 4, kind: output, shape index: {0}]
  %s5 = inlined_call_operand.vmem [shape: f32[2,8,128], index: 5, kind: output, shape index: {1}]
  %6 = xla_tuple %s4, %s5
  %s7 = sld [smem:[#allocation0]]
  $region34: #{bert_entity_forward.1} parent=0
    _
  %s9 = ssub.s32 1, %s7
  %s10 = scalar_select 0, %s9, %s7
  $region1: #{bert_entity_forward.1} parent=0
    #allocation2 [shape = 'u8[8192]{0}', space=vmem, size = 0x2000, scoped, tag = 'output window, operand 0, single buffered']
    #allocation3 [shape = 's32[1]{0}', space=sflag, size = 0x4, scoped, tag = 'scoped memory for bert_entity_forward.1']
    %11 = vsyncpa [#allocation3], 0
    // Predicated region
    $region2: #{bert_entity_forward.1} parent=1 // pred_check
      _
    $region3: #{bert_entity_forward.1} parent=1 // pred_check_branch
      %13 = sbr.rel (0) target = $region5
    $region4: #{bert_entity_forward.1} parent=1 // pred_region
      _
    $region5: #{bert_entity_forward.1} parent=1 // pred_fallthru
      _
    // Predicated region
    $region6: #{bert_entity_forward.1} parent=1 // pred_check
      _
    $region7: #{bert_entity_forward.1} parent=1 // pred_check_branch
      %15 = sbr.rel (0) target = $region9
    $region8: #{bert_entity_forward.1} parent=1 // pred_region
      _
    $region9: #{bert_entity_forward.1} parent=1 // pred_fallthru
      _
    // Predicated region
    $region10: #{bert_entity_forward.1} parent=1 // pred_check
      _
    $region11: #{bert_entity_forward.1} parent=1 // pred_check_branch
      %17 = sbr.rel (0) target = $region13
    $region12: #{bert_entity_forward.1} parent=1 // pred_region
      _
    $region13: #{bert_entity_forward.1} parent=1 // pred_fallthru
      _
    // Predicated region
    $region14: #{bert_entity_forward.1} parent=1 // pred_check
      _
    $region15: #{bert_entity_forward.1} parent=1 // pred_check_branch
      %19 = sbr.rel (0) target = $region17
    $region16: #{bert_entity_forward.1} parent=1 // pred_region
      _
    $region17: #{bert_entity_forward.1} parent=1 // pred_fallthru
      _
    %v20 = vld [vmem:[%s0] sm:$0x3]
    %v21 = vlaneseq
    %v22 = vand.u32 %v21, 127
    %v23 = vperm.slane %v20, 0
    %v24 = vlaneseq
    %v25 = vshrl.u32 %v24, 7
    %27 = vset.pattern.permute.xlu0 %v25
    %28 = vperm.xlu0 %27, %v23
    %v29 = vpop.permute.xlu0 %28
    %v30 = vperm.slane %v20, 1
    %v31 = vlaneseq
    %v32 = vshrl.u32 %v31, 7
    %34 = vset.pattern.permute.xlu0 %v32
    %35 = vperm.xlu0 %34, %v30
    %v36 = vpop.permute.xlu0 %35
    %vm37 = vcmp.eq.s32.totalorder %v22, %v29
    %vm38 = vcmp.eq.s32.totalorder %v22, %v36
    %v39 = vsel %vm37, 1, 0
    %v40 = vsel %vm38, 1, 0
    %v41 = vcvt.s32.f32 %v39
    %v42 = vcvt.s32.f32 %v40
    %v43 = vld [vmem:[%s1] sm:$0xff]
    %v44 = vld [vmem:[%s1 + $0x8] sm:$0xff]
    %vm45 = vcmask 64512
    %v47 = vsel %vm45, %v41, 0
    %49 = vmatpush.msra.mxu0 0.0
    %50 = vmatpush.msra.mxu0 0.0
    %51 = vmatpush.msra.mxu0 0.0
    %52 = vmatpush.msra.mxu0 0.0
    %53 = vmatpush.msra.mxu0 0.0
    %54 = vmatpush.msra.mxu0 0.0
    %55 = vmatpush.msra.mxu0 0.0
    %56 = vmatpush.msra.mxu0 0.0
    %57 = vmatpush.msra.mxu0 0.0
    %58 = vmatpush.msra.mxu0 0.0
    %59 = vmatpush.msra.mxu0 0.0
    %60 = vmatpush.msra.mxu0 0.0
    %61 = vmatpush.msra.mxu0 0.0
    %62 = vmatpush.msra.mxu0 0.0
    %63 = vmatpush.msra.mxu0 0.0
    %v64 = vand.u32 %v43, 4294901760
    %65 = vmatpush.msra.mxu0 %v64
    %v66 = vand.u32 %v47, 4294901760
    %v67 = vsub.f32 %v47, %v66
    %v68 = vand.u32 %v67, 4294901760
    %v69 = vsub.f32 %v67, %v68
    %v70 = vand.u32 %v69, 4294901760
    %71 = vmatmul.f32.gmra.mxu0 %v70
    %v72 = vpop.f32.mrf.mxu0
    %v73 = vadd.f32 0.0, %v72
    %74 = vdwg.mxu0
    %75 = vmatpush.msra.mxu0 0.0
    %76 = vmatpush.msra.mxu0 0.0
    %77 = vmatpush.msra.mxu0 0.0
    %78 = vmatpush.msra.mxu0 0.0
    %79 = vmatpush.msra.mxu0 0.0
    %80 = vmatpush.msra.mxu0 0.0
    %81 = vmatpush.msra.mxu0 0.0
    %82 = vmatpush.msra.mxu0 0.0
    %83 = vmatpush.msra.mxu0 0.0
    %84 = vmatpush.msra.mxu0 0.0
    %85 = vmatpush.msra.mxu0 0.0
    %86 = vmatpush.msra.mxu0 0.0
    %87 = vmatpush.msra.mxu0 0.0
    %88 = vmatpush.msra.mxu0 0.0
    %89 = vmatpush.msra.mxu0 0.0
    %v90 = vand.u32 %v43, 4294901760
    %v91 = vsub.f32 %v43, %v90
    %v92 = vand.u32 %v91, 4294901760
    %v93 = vsub.f32 %v91, %v92
    %v94 = vand.u32 %v93, 4294901760
    %95 = vmatpush.msra.mxu0 %v94
    %v96 = vand.u32 %v47, 4294901760
    %97 = vmatmul.f32.gmra.mxu0 %v96
    %v98 = vpop.f32.mrf.mxu0
    %v99 = vadd.f32 %v73, %v98
    %100 = vdwg.mxu0
    %101 = vmatpush.msra.mxu0 0.0
    %102 = vmatpush.msra.mxu0 0.0
    %103 = vmatpush.msra.mxu0 0.0
    %104 = vmatpush.msra.mxu0 0.0
    %105 = vmatpush.msra.mxu0 0.0
    %106 = vmatpush.msra.mxu0 0.0
    %107 = vmatpush.msra.mxu0 0.0
    %108 = vmatpush.msra.mxu0 0.0
    %109 = vmatpush.msra.mxu0 0.0
    %110 = vmatpush.msra.mxu0 0.0
    %111 = vmatpush.msra.mxu0 0.0
    %112 = vmatpush.msra.mxu0 0.0
    %113 = vmatpush.msra.mxu0 0.0
    %114 = vmatpush.msra.mxu0 0.0
    %115 = vmatpush.msra.mxu0 0.0
    %v116 = vand.u32 %v43, 4294901760
    %v117 = vsub.f32 %v43, %v116
    %118 = vmatpush.msra.mxu0 %v117
    %v119 = vand.u32 %v47, 4294901760
    %v120 = vsub.f32 %v47, %v119
    %121 = vmatmul.f32.gmra.mxu0 %v120
    %v122 = vpop.f32.mrf.mxu0
    %v123 = vadd.f32 %v99, %v122
    %124 = vdwg.mxu0
    %125 = vmatpush.msra.mxu0 0.0
    %126 = vmatpush.msra.mxu0 0.0
    %127 = vmatpush.msra.mxu0 0.0
    %128 = vmatpush.msra.mxu0 0.0
    %129 = vmatpush.msra.mxu0 0.0
    %130 = vmatpush.msra.mxu0 0.0
    %131 = vmatpush.msra.mxu0 0.0
    %132 = vmatpush.msra.mxu0 0.0
    %133 = vmatpush.msra.mxu0 0.0
    %134 = vmatpush.msra.mxu0 0.0
    %135 = vmatpush.msra.mxu0 0.0
    %136 = vmatpush.msra.mxu0 0.0
    %137 = vmatpush.msra.mxu0 0.0
    %138 = vmatpush.msra.mxu0 0.0
    %139 = vmatpush.msra.mxu0 0.0
    %v140 = vand.u32 %v43, 4294901760
    %141 = vmatpush.msra.mxu0 %v140
    %v142 = vand.u32 %v47, 4294901760
    %v143 = vsub.f32 %v47, %v142
    %v144 = vand.u32 %v143, 4294901760
    %145 = vmatmul.f32.gmra.mxu0 %v144
    %v146 = vpop.f32.mrf.mxu0
    %v147 = vadd.f32 %v123, %v146
    %148 = vdwg.mxu0
    %149 = vmatpush.msra.mxu0 0.0
    %150 = vmatpush.msra.mxu0 0.0
    %151 = vmatpush.msra.mxu0 0.0
    %152 = vmatpush.msra.mxu0 0.0
    %153 = vmatpush.msra.mxu0 0.0
    %154 = vmatpush.msra.mxu0 0.0
    %155 = vmatpush.msra.mxu0 0.0
    %156 = vmatpush.msra.mxu0 0.0
    %157 = vmatpush.msra.mxu0 0.0
    %158 = vmatpush.msra.mxu0 0.0
    %159 = vmatpush.msra.mxu0 0.0
    %160 = vmatpush.msra.mxu0 0.0
    %161 = vmatpush.msra.mxu0 0.0
    %162 = vmatpush.msra.mxu0 0.0
    %163 = vmatpush.msra.mxu0 0.0
    %v164 = vand.u32 %v43, 4294901760
    %v165 = vsub.f32 %v43, %v164
    %v166 = vand.u32 %v165, 4294901760
    %167 = vmatpush.msra.mxu0 %v166
    %v168 = vand.u32 %v47, 4294901760
    %169 = vmatmul.f32.gmra.mxu0 %v168
    %v170 = vpop.f32.mrf.mxu0
    %v171 = vadd.f32 %v147, %v170
    %172 = vdwg.mxu0
    %173 = vmatpush.msra.mxu0 0.0
    %174 = vmatpush.msra.mxu0 0.0
    %175 = vmatpush.msra.mxu0 0.0
    %176 = vmatpush.msra.mxu0 0.0
    %177 = vmatpush.msra.mxu0 0.0
    %178 = vmatpush.msra.mxu0 0.0
    %179 = vmatpush.msra.mxu0 0.0
    %180 = vmatpush.msra.mxu0 0.0
    %181 = vmatpush.msra.mxu0 0.0
    %182 = vmatpush.msra.mxu0 0.0
    %183 = vmatpush.msra.mxu0 0.0
    %184 = vmatpush.msra.mxu0 0.0
    %185 = vmatpush.msra.mxu0 0.0
    %186 = vmatpush.msra.mxu0 0.0
    %187 = vmatpush.msra.mxu0 0.0
    %v188 = vand.u32 %v43, 4294901760
    %189 = vmatpush.msra.mxu0 %v188
    %v190 = vand.u32 %v47, 4294901760
    %191 = vmatmul.f32.gmra.mxu0 %v190
    %v192 = vpop.f32.mrf.mxu0
    %v193 = vadd.f32 %v171, %v192
    %194 = vdwg.mxu0
    %v196 = vsel %vm45, %v42, 0
    %198 = vmatpush.msra.mxu0 0.0
    %199 = vmatpush.msra.mxu0 0.0
    %200 = vmatpush.msra.mxu0 0.0
    %201 = vmatpush.msra.mxu0 0.0
    %202 = vmatpush.msra.mxu0 0.0
    %203 = vmatpush.msra.mxu0 0.0
    %204 = vmatpush.msra.mxu0 0.0
    %205 = vmatpush.msra.mxu0 0.0
    %206 = vmatpush.msra.mxu0 0.0
    %207 = vmatpush.msra.mxu0 0.0
    %208 = vmatpush.msra.mxu0 0.0
    %209 = vmatpush.msra.mxu0 0.0
    %210 = vmatpush.msra.mxu0 0.0
    %211 = vmatpush.msra.mxu0 0.0
    %212 = vmatpush.msra.mxu0 0.0
    %v213 = vand.u32 %v44, 4294901760
    %214 = vmatpush.msra.mxu0 %v213
    %v215 = vand.u32 %v196, 4294901760
    %v216 = vsub.f32 %v196, %v215
    %v217 = vand.u32 %v216, 4294901760
    %v218 = vsub.f32 %v216, %v217
    %v219 = vand.u32 %v218, 4294901760
    %220 = vmatmul.f32.gmra.mxu0 %v219
    %v221 = vpop.f32.mrf.mxu0
    %v222 = vadd.f32 0.0, %v221
    %223 = vdwg.mxu0
    %224 = vmatpush.msra.mxu0 0.0
    %225 = vmatpush.msra.mxu0 0.0
    %226 = vmatpush.msra.mxu0 0.0
    %227 = vmatpush.msra.mxu0 0.0
    %228 = vmatpush.msra.mxu0 0.0
    %229 = vmatpush.msra.mxu0 0.0
    %230 = vmatpush.msra.mxu0 0.0
    %231 = vmatpush.msra.mxu0 0.0
    %232 = vmatpush.msra.mxu0 0.0
    %233 = vmatpush.msra.mxu0 0.0
    %234 = vmatpush.msra.mxu0 0.0
    %235 = vmatpush.msra.mxu0 0.0
    %236 = vmatpush.msra.mxu0 0.0
    %237 = vmatpush.msra.mxu0 0.0
    %238 = vmatpush.msra.mxu0 0.0
    %v239 = vand.u32 %v44, 4294901760
    %v240 = vsub.f32 %v44, %v239
    %v241 = vand.u32 %v240, 4294901760
    %v242 = vsub.f32 %v240, %v241
    %v243 = vand.u32 %v242, 4294901760
    %244 = vmatpush.msra.mxu0 %v243
    %v245 = vand.u32 %v196, 4294901760
    %246 = vmatmul.f32.gmra.mxu0 %v245
    %v247 = vpop.f32.mrf.mxu0
    %v248 = vadd.f32 %v222, %v247
    %249 = vdwg.mxu0
    %250 = vmatpush.msra.mxu0 0.0
    %251 = vmatpush.msra.mxu0 0.0
    %252 = vmatpush.msra.mxu0 0.0
    %253 = vmatpush.msra.mxu0 0.0
    %254 = vmatpush.msra.mxu0 0.0
    %255 = vmatpush.msra.mxu0 0.0
    %256 = vmatpush.msra.mxu0 0.0
    %257 = vmatpush.msra.mxu0 0.0
    %258 = vmatpush.msra.mxu0 0.0
    %259 = vmatpush.msra.mxu0 0.0
    %260 = vmatpush.msra.mxu0 0.0
    %261 = vmatpush.msra.mxu0 0.0
    %262 = vmatpush.msra.mxu0 0.0
    %263 = vmatpush.msra.mxu0 0.0
    %264 = vmatpush.msra.mxu0 0.0
    %v265 = vand.u32 %v44, 4294901760
    %v266 = vsub.f32 %v44, %v265
    %267 = vmatpush.msra.mxu0 %v266
    %v268 = vand.u32 %v196, 4294901760
    %v269 = vsub.f32 %v196, %v268
    %270 = vmatmul.f32.gmra.mxu0 %v269
    %v271 = vpop.f32.mrf.mxu0
    %v272 = vadd.f32 %v248, %v271
    %273 = vdwg.mxu0
    %274 = vmatpush.msra.mxu0 0.0
    %275 = vmatpush.msra.mxu0 0.0
    %276 = vmatpush.msra.mxu0 0.0
    %277 = vmatpush.msra.mxu0 0.0
    %278 = vmatpush.msra.mxu0 0.0
    %279 = vmatpush.msra.mxu0 0.0
    %280 = vmatpush.msra.mxu0 0.0
    %281 = vmatpush.msra.mxu0 0.0
    %282 = vmatpush.msra.mxu0 0.0
    %283 = vmatpush.msra.mxu0 0.0
    %284 = vmatpush.msra.mxu0 0.0
    %285 = vmatpush.msra.mxu0 0.0
    %286 = vmatpush.msra.mxu0 0.0
    %287 = vmatpush.msra.mxu0 0.0
    %288 = vmatpush.msra.mxu0 0.0
    %v289 = vand.u32 %v44, 4294901760
    %290 = vmatpush.msra.mxu0 %v289
    %v291 = vand.u32 %v196, 4294901760
    %v292 = vsub.f32 %v196, %v291
    %v293 = vand.u32 %v292, 4294901760
    %294 = vmatmul.f32.gmra.mxu0 %v293
    %v295 = vpop.f32.mrf.mxu0
    %v296 = vadd.f32 %v272, %v295
    %297 = vdwg.mxu0
    %298 = vmatpush.msra.mxu0 0.0
    %299 = vmatpush.msra.mxu0 0.0
    %300 = vmatpush.msra.mxu0 0.0
    %301 = vmatpush.msra.mxu0 0.0
    %302 = vmatpush.msra.mxu0 0.0
    %303 = vmatpush.msra.mxu0 0.0
    %304 = vmatpush.msra.mxu0 0.0
    %305 = vmatpush.msra.mxu0 0.0
    %306 = vmatpush.msra.mxu0 0.0
    %307 = vmatpush.msra.mxu0 0.0
    %308 = vmatpush.msra.mxu0 0.0
    %309 = vmatpush.msra.mxu0 0.0
    %310 = vmatpush.msra.mxu0 0.0
    %311 = vmatpush.msra.mxu0 0.0
    %312 = vmatpush.msra.mxu0 0.0
    %v313 = vand.u32 %v44, 4294901760
    %v314 = vsub.f32 %v44, %v313
    %v315 = vand.u32 %v314, 4294901760
    %316 = vmatpush.msra.mxu0 %v315
    %v317 = vand.u32 %v196, 4294901760
    %318 = vmatmul.f32.gmra.mxu0 %v317
    %v319 = vpop.f32.mrf.mxu0
    %v320 = vadd.f32 %v296, %v319
    %321 = vdwg.mxu0
    %322 = vmatpush.msra.mxu0 0.0
    %323 = vmatpush.msra.mxu0 0.0
    %324 = vmatpush.msra.mxu0 0.0
    %325 = vmatpush.msra.mxu0 0.0
    %326 = vmatpush.msra.mxu0 0.0
    %327 = vmatpush.msra.mxu0 0.0
    %328 = vmatpush.msra.mxu0 0.0
    %329 = vmatpush.msra.mxu0 0.0
    %330 = vmatpush.msra.mxu0 0.0
    %331 = vmatpush.msra.mxu0 0.0
    %332 = vmatpush.msra.mxu0 0.0
    %333 = vmatpush.msra.mxu0 0.0
    %334 = vmatpush.msra.mxu0 0.0
    %335 = vmatpush.msra.mxu0 0.0
    %336 = vmatpush.msra.mxu0 0.0
    %v337 = vand.u32 %v44, 4294901760
    %338 = vmatpush.msra.mxu0 %v337
    %v339 = vand.u32 %v196, 4294901760
    %340 = vmatmul.f32.gmra.mxu0 %v339
    %v341 = vpop.f32.mrf.mxu0
    %v342 = vadd.f32 %v320, %v341
    %343 = vdwg.mxu0
    %344 = vst [vmem:[#allocation2] sm:$0xff] %v193
    %345 = vst [vmem:[#allocation2 + $0x8] sm:$0xff] %v342
    %v346 = vld [vmem:[%s2] sm:$0xff]
    %v347 = vld [vmem:[%s2 + $0x8] sm:$0xff]
    %v348 = vld [vmem:[%s2 + $0x10] sm:$0xff]
    %v349 = vld [vmem:[%s2 + $0x18] sm:$0xff]
    %v350 = vld [vmem:[%s2 + $0x20] sm:$0xff]
    %v351 = vld [vmem:[%s2 + $0x28] sm:$0xff]
    %v352 = vld [vmem:[%s2 + $0x30] sm:$0xff]
    %v353 = vld [vmem:[%s2 + $0x38] sm:$0xff]
    %v354 = vld [vmem:[%s2 + $0x40] sm:$0xff]
    %v355 = vld [vmem:[%s2 + $0x48] sm:$0xff]
    %v356 = vld [vmem:[%s2 + $0x50] sm:$0xff]
    %v357 = vld [vmem:[%s2 + $0x58] sm:$0xff]
    %v358 = vld [vmem:[%s2 + $0x60] sm:$0xff]
    %v359 = vld [vmem:[%s2 + $0x68] sm:$0xff]
    %v360 = vld [vmem:[%s2 + $0x70] sm:$0xff]
    %v361 = vld [vmem:[%s2 + $0x78] sm:$0xff]
    %362 = vmatpush.msra.mxu0 %v361
    %363 = vmatpush.msra.mxu0 %v360
    %364 = vmatpush.msra.mxu0 %v359
    %365 = vmatpush.msra.mxu0 %v358
    %366 = vmatpush.msra.mxu0 %v357
    %367 = vmatpush.msra.mxu0 %v356
    %368 = vmatpush.msra.mxu0 %v355
    %369 = vmatpush.msra.mxu0 %v354
    %370 = vmatpush.msra.mxu0 %v353
    %371 = vmatpush.msra.mxu0 %v352
    %372 = vmatpush.msra.mxu0 %v351
    %373 = vmatpush.msra.mxu0 %v350
    %374 = vmatpush.msra.mxu0 %v349
    %375 = vmatpush.msra.mxu0 %v348
    %376 = vmatpush.msra.mxu0 %v347
    %377 = vmatpush.msra.mxu0 %v346
    %378 = vmatmul.f32.gmra.mxu0 %v193
    %v379 = vpop.f32.mrf.mxu0
    %v380 = vadd.f32 0.0, %v379
    %381 = vmatmul.f32.gmra.mxu0 %v342
    %v382 = vpop.f32.mrf.mxu0
    %v383 = vadd.f32 0.0, %v382
    %384 = vdwg.mxu0
    %v385 = vld [vmem:[%s3] sm:$0x1]
    %v387 = vperm.slane %v385, 0
    %v389 = vadd.f32 %v380, %v387
    %v390 = vadd.f32 %v383, %v387
    %391 = vst [vmem:[%s5] sm:$0xff] %v389
    %392 = vst [vmem:[%s5 + $0x8] sm:$0xff] %v390
    // Predicated region
    $region18: #{bert_entity_forward.1} parent=1 // pred_check
      _
    $region19: #{bert_entity_forward.1} parent=1 // pred_check_branch
      %394 = sbr.rel (0) target = $region21
    $region20: #{bert_entity_forward.1} parent=1 // pred_region
      %396 = vsyncadd [#allocation3], 0
      %s397 = sshll.u32 [#allocation2], 4
      %s398 = int_to_ptr.vmem [resolvable:$true] %s397
      %s399 = sshll.u32 %s4, 4
      %s400 = int_to_ptr.hbm [resolvable:$true] %s399
      %405 = dma.vmem_to_hbm [thread:$0]  %s398, 256, %s400, [#allocation3], 128, 128, 8
    $region21: #{bert_entity_forward.1} parent=1 // pred_fallthru
      _
    // Predicated region
    $region22: #{bert_entity_forward.1} parent=1 // pred_check
      _
    $region23: #{bert_entity_forward.1} parent=1 // pred_check_branch
      %407 = sbr.rel (0) target = $region25
    $region24: #{bert_entity_forward.1} parent=1 // pred_region
      _
    $region25: #{bert_entity_forward.1} parent=1 // pred_fallthru
      _
    // Predicated region
    $region26: #{bert_entity_forward.1} parent=1 // pred_check
      _
    $region27: #{bert_entity_forward.1} parent=1 // pred_check_branch
      %409 = sbr.rel (0) target = $region29
    $region28: #{bert_entity_forward.1} parent=1 // pred_region
      %411 = dma.done [#allocation3], 256
    $region29: #{bert_entity_forward.1} parent=1 // pred_fallthru
      _
    // Predicated region
    $region30: #{bert_entity_forward.1} parent=1 // pred_check
      _
    $region31: #{bert_entity_forward.1} parent=1 // pred_check_branch
      %413 = sbr.rel (0) target = $region33
    $region32: #{bert_entity_forward.1} parent=1 // pred_region
      _
    $region33: #{bert_entity_forward.1} parent=1 // pred_fallthru
      _
    %414 = vsyncpa [#allocation3], 1

</llo_original>
